<compile_context>
chip_gen: v7x
topology: tpu7x:2x2x1
jax: 0.10.0
libtpu: 0.0.40
codegen_flags: <defaults>
</compile_context>

<pallas_src>
import functools

import jax
import jax.numpy as jnp
from jax import lax
from jax.experimental import pallas as pl
from jax.experimental.pallas import tpu as pltpu


def _round_up(x, m):
    return ((x + m - 1) // m) * m


def _make_kernel(N, Cpad, H, W, kH, kW, sh, Lq, Lw, src_off):
    Wo = W + kW - 1                  # stride_w == 1
    Wp = Wo + kW - 1                 # flat-plane row stride
    base = (kH - 1) * Wp + (kW - 1)  # lane of input pixel (ih=0, iw=0) in the plane

    def kernel(x_ref, w_ref, o_ref, patch_ref):
        # x_ref     : (N, Cpad, Lsrc)  channel-padded input, rows flattened and placed
        #                              at lane offset `src_off` (all shifts below are
        #                              plain static slices).
        # w_ref     : (Cout, kH*kW*Cpad) flipped, block-diagonal grouped weight matrix.
        # o_ref     : (N, Cout, Lq)    lane-dense output (Lq % 128 == 0).
        # patch_ref : (kH*kW*Cpad, N*Lq) lane-dense im2col scratch (VMEM).
        lane = lax.broadcasted_iota(jnp.int32, (Cpad, Lw), 1)

        for n in range(N):                       # batch folded into one grid step
            x_n = x_ref[n]                       # (Cpad, Lsrc)

            # --- flat zero-dilated / zero-padded plane, built lane-dense ---------
            # plane[c, base + ih*sh*Wp + iw] = x[n, c, ih, iw]; everything else 0.
            plane = jnp.zeros((Cpad, Lw), jnp.float32)
            for ih in range(H):
                dst0 = base + ih * sh * Wp       # target lane of x[c, ih, 0]
                start = src_off + ih * W - dst0  # >= 0 by construction of src_off
                shifted = x_n[:, start:start + Lw]   # row ih lands at [dst0, dst0+W)
                keep = (lane >= dst0) & (lane < dst0 + W)
                plane = plane + jnp.where(keep, shifted, 0.0)

            # --- im2col written directly lane-dense into the VMEM scratch --------
            # patch[(kh*kW + kw)*Cpad + c, n*Lq + q] = plane[c, q + kh*Wp + kw]
            for kh in range(kH):
                for kw in range(kW):
                    t = kh * kW + kw
                    s = kh * Wp + kw
                    patch_ref[pl.ds(t * Cpad, Cpad), pl.ds(n * Lq, Lq)] = (
                        plane[:, s:s + Lq])

        # --- one block-diagonal grouped contraction for all groups/taps/batch ----
        acc = jnp.dot(w_ref[...], patch_ref[...],
                      preferred_element_type=jnp.float32)     # (Cout, N*Lq)

        # --- fused sigmoid + lane-dense (unmasked) stores -------------------------
        for n in range(N):
            o_ref[n] = jax.nn.sigmoid(acc[:, n * Lq:(n + 1) * Lq]).astype(o_ref.dtype)

    return kernel


@functools.partial(jax.jit, static_argnames=("stride", "groups"))
def conv_transpose_sigmoid(x, w, *, stride, groups):
    """x: (N, Cin, H, W) NCHW.  w: (Cin, Cout//groups, kH, kW) (PyTorch layout).
    Returns sigmoid(conv_transpose2d(x, w, stride=stride, groups=groups,
    padding=0, output_padding=0, bias=None)) in NCHW."""
    N, Cin, H, W = x.shape
    Cin_w, Cout_g, kH, kW = w.shape
    assert Cin == Cin_w
    G = groups
    assert Cin % G == 0
    Cin_g = Cin // G
    Cout = Cout_g * G
    sh, sw = stride
    assert sw == 1, "kernel specialised for stride_w == 1 (as in the module spec)"

    Ho = (H - 1) * sh + kH
    Wo = (W - 1) * sw + kW
    Wp = Wo + kW - 1                       # flat-plane row stride
    base = (kH - 1) * Wp + (kW - 1)
    Cpad = _round_up(Cin, 8)               # sublane-aligned tap blocks
    Kp = kH * kW * Cpad
    Lq = _round_up(Ho * Wp, 128)           # per-item output lanes (lane-dense)
    Lw = _round_up(base + Lq, 128)         # flat plane width (slice source)
    src_off = base + (H - 1) * (sh * Wp - W)   # input placement -> all shifts >= 0
    Lsrc = _round_up(src_off + Lw, 128)

    # --- one-time weight prep: flipped, grouped block-diagonal, channel-padded ---
    # w_mat[g*Cout_g + o, (kh*kW + kw)*Cpad + c] = w[c, o, kH-1-kh, kW-1-kw]
    #   if channel c belongs to group g, else 0 (columns for c >= Cin are zero).
    w_flip = w.astype(jnp.float32)[:, :, ::-1, ::-1]           # (Cin, Cout_g, kH, kW)
    w5 = w_flip.reshape(G, Cin_g, Cout_g, kH, kW)
    w_r = jnp.transpose(w5, (0, 2, 3, 4, 1))                   # (G, Cout_g, kH, kW, Cin_g)
    w_full = jnp.zeros((G, Cout_g, kH, kW, Cpad), jnp.float32)
    for g in range(G):
        w_full = w_full.at[g, :, :, :, g * Cin_g:(g + 1) * Cin_g].set(w_r[g])
    w_mat = w_full.reshape(Cout, Kp)

    # --- input prep: pad channels to a sublane multiple, flatten spatial, place at
    #     lane offset src_off (compact input only -- no stride-inflated HBM array) ---
    x_k = jnp.pad(x.astype(jnp.float32).reshape(N, Cin, H * W),
                  ((0, 0), (0, Cpad - Cin), (src_off, Lsrc - src_off - H * W)))

    kernel = _make_kernel(N, Cpad, H, W, kH, kW, sh, Lq, Lw, src_off)

    out = pl.pallas_call(
        kernel,
        out_shape=jax.ShapeDtypeStruct((N, Cout, Lq), jnp.float32),
        grid=(1,),
        in_specs=[
            pl.BlockSpec((N, Cpad, Lsrc), lambda i: (0, 0, 0)),
            pl.BlockSpec((Cout, Kp), lambda i: (0, 0)),        # resident weights
        ],
        out_specs=pl.BlockSpec((N, Cout, Lq), lambda i: (0, 0, 0)),
        scratch_shapes=[pltpu.VMEM((Kp, N * Lq), jnp.float32)],
        compiler_params=pltpu.CompilerParams(
            dimension_semantics=("arbitrary",)),
    )(x_k, w_mat)

    # Valid lanes are q = oh*Wp + ow with ow < Wo; row-major reshape + cheap slices.
    y = out[:, :, :Ho * Wp].reshape(N, Cout, Ho, Wp)[:, :, :, :Wo]
    return y


def _reference(x, w, *, stride, groups):
    """Plain-JAX ConvTranspose2d + sigmoid (for verification)."""
    Cin, Cout_g, kH, kW = w.shape
    G = groups
    Cin_g = Cin // G
    sh, sw = stride
    w5 = w.reshape(G, Cin_g, Cout_g, kH, kW)
    w_conv = w5[:, :, :, ::-1, ::-1].transpose(0, 2, 1, 3, 4).reshape(
        G * Cout_g, Cin_g, kH, kW)                                  # OIHW
    y = lax.conv_general_dilated(
        x, w_conv, window_strides=(1, 1),
        padding=[(kH - 1, kH - 1), (kW - 1, kW - 1)],
        lhs_dilation=(sh, sw), rhs_dilation=(1, 1),
        dimension_numbers=("NCHW", "OIHW", "NCHW"),
        feature_group_count=G)
    return jax.nn.sigmoid(y)


if __name__ == "__main__":
    # Small, valid stand-in for ConvTranspose2d(6, 88, (973, 835), stride=(822, 1), groups=3)
    N, Cin, H, W = 2, 6, 4, 8
    groups = 3
    Cout = 12
    kH, kW = 5, 3
    stride = (2, 1)

    key = jax.random.PRNGKey(0)
    kx, kw_ = jax.random.split(key)
    x = jax.random.normal(kx, (N, Cin, H, W), dtype=jnp.float32)
    # PyTorch weight layout for ConvTranspose2d: (Cin, Cout // groups, kH, kW)
    w = 0.1 * jax.random.normal(kw_, (Cin, Cout // groups, kH, kW), dtype=jnp.float32)

    out = conv_transpose_sigmoid(x, w, stride=stride, groups=groups)
    out = jax.block_until_ready(out)

    ref = _reference(x, w, stride=stride, groups=groups)
    assert out.shape == ref.shape, (out.shape, ref.shape)
    assert jnp.allclose(out, ref, atol=1e-5, rtol=1e-5), float(jnp.max(jnp.abs(out - ref)))

    print("KERNEL_OK")
</pallas_src>

<mosaic_0001>
module attributes {stable_mosaic.version = 11 : i64} {
  func.func @kernel(%arg0: i32, %arg1: memref<2x8x512xf32, #tpu.memory_space<vmem>>, %arg2: memref<12x120xf32, #tpu.memory_space<vmem>>, %arg3: memref<2x12x256xf32, #tpu.memory_space<vmem>>, %arg4: memref<120x512xf32, #tpu.memory_space<vmem>>) attributes {dimension_semantics = [#tpu.dimension_semantics<arbitrary>], iteration_bounds = array<i64: 1>, scalar_prefetch = 0 : i64, scratch_operands = 1 : i64, tpu.core_type = #tpu.core_type<tc>, window_params = [{pipeline_mode = #tpu.pipeline_mode<synchronous>, transform_indices = @transform_0, window_bounds = array<i64: 2, 8, 512>}, {pipeline_mode = #tpu.pipeline_mode<synchronous>, transform_indices = @transform_1, window_bounds = array<i64: 12, 120>}, {pipeline_mode = #tpu.pipeline_mode<synchronous>, transform_indices = @transform_2, window_bounds = array<i64: 2, 12, 256>}]} {
    %0 = tpu.iota {dimensions = array<i32: 1>} : vector<8x384xi32>
    %c0 = arith.constant 0 : index
    %c0_0 = arith.constant 0 : index
    %c0_1 = arith.constant 0 : index
    %1 = vector.load %arg1[%c0, %c0_0, %c0_1] : memref<2x8x512xf32, #tpu.memory_space<vmem>>, vector<1x8x512xf32>
    %2 = vector.shape_cast %1 : vector<1x8x512xf32> to vector<8x512xf32>
    %cst = arith.constant 0.000000e+00 : f32
    %3 = vector.broadcast %cst : f32 to vector<8x384xf32>
    %4 = vector.extract_strided_slice %2 {offsets = [0, 48], sizes = [8, 384], strides = [1, 1]} : vector<8x512xf32> to vector<8x384xf32>
    %c50_i32 = arith.constant 50 : i32
    %5 = vector.broadcast %c50_i32 : i32 to vector<8x384xi32>
    %6 = arith.cmpi sge, %0, %5 : vector<8x384xi32>
    %c58_i32 = arith.constant 58 : i32
    %7 = vector.broadcast %c58_i32 : i32 to vector<8x384xi32>
    %8 = arith.cmpi slt, %0, %7 : vector<8x384xi32>
    %9 = arith.andi %6, %8 : vector<8x384xi1>
    %cst_2 = arith.constant 0.000000e+00 : f32
    %10 = vector.broadcast %cst_2 : f32 to vector<8x384xf32>
    %11 = arith.select %9, %4, %10 : vector<8x384xi1>, vector<8x384xf32>
    %12 = arith.addf %3, %11 : vector<8x384xf32>
    %13 = vector.extract_strided_slice %2 {offsets = [0, 32], sizes = [8, 384], strides = [1, 1]} : vector<8x512xf32> to vector<8x384xf32>
    %c74_i32 = arith.constant 74 : i32
    %14 = vector.broadcast %c74_i32 : i32 to vector<8x384xi32>
    %15 = arith.cmpi sge, %0, %14 : vector<8x384xi32>
    %c82_i32 = arith.constant 82 : i32
    %16 = vector.broadcast %c82_i32 : i32 to vector<8x384xi32>
    %17 = arith.cmpi slt, %0, %16 : vector<8x384xi32>
    %18 = arith.andi %15, %17 : vector<8x384xi1>
    %cst_3 = arith.constant 0.000000e+00 : f32
    %19 = vector.broadcast %cst_3 : f32 to vector<8x384xf32>
    %20 = arith.select %18, %13, %19 : vector<8x384xi1>, vector<8x384xf32>
    %21 = arith.addf %12, %20 : vector<8x384xf32>
    %22 = vector.extract_strided_slice %2 {offsets = [0, 16], sizes = [8, 384], strides = [1, 1]} : vector<8x512xf32> to vector<8x384xf32>
    %c98_i32 = arith.constant 98 : i32
    %23 = vector.broadcast %c98_i32 : i32 to vector<8x384xi32>
    %24 = arith.cmpi sge, %0, %23 : vector<8x384xi32>
    %c106_i32 = arith.constant 106 : i32
    %25 = vector.broadcast %c106_i32 : i32 to vector<8x384xi32>
    %26 = arith.cmpi slt, %0, %25 : vector<8x384xi32>
    %27 = arith.andi %24, %26 : vector<8x384xi1>
    %cst_4 = arith.constant 0.000000e+00 : f32
    %28 = vector.broadcast %cst_4 : f32 to vector<8x384xf32>
    %29 = arith.select %27, %22, %28 : vector<8x384xi1>, vector<8x384xf32>
    %30 = arith.addf %21, %29 : vector<8x384xf32>
    %31 = vector.extract_strided_slice %2 {offsets = [0, 0], sizes = [8, 384], strides = [1, 1]} : vector<8x512xf32> to vector<8x384xf32>
    %c122_i32 = arith.constant 122 : i32
    %32 = vector.broadcast %c122_i32 : i32 to vector<8x384xi32>
    %33 = arith.cmpi sge, %0, %32 : vector<8x384xi32>
    %c130_i32 = arith.constant 130 : i32
    %34 = vector.broadcast %c130_i32 : i32 to vector<8x384xi32>
    %35 = arith.cmpi slt, %0, %34 : vector<8x384xi32>
    %36 = arith.andi %33, %35 : vector<8x384xi1>
    %cst_5 = arith.constant 0.000000e+00 : f32
    %37 = vector.broadcast %cst_5 : f32 to vector<8x384xf32>
    %38 = arith.select %36, %31, %37 : vector<8x384xi1>, vector<8x384xf32>
    %39 = arith.addf %30, %38 : vector<8x384xf32>
    %40 = vector.extract_strided_slice %39 {offsets = [0, 0], sizes = [8, 256], strides = [1, 1]} : vector<8x384xf32> to vector<8x256xf32>
    %c0_6 = arith.constant 0 : index
    %c0_7 = arith.constant 0 : index
    %41 = vector.load %arg4[%c0_6, %c0_7] : memref<120x512xf32, #tpu.memory_space<vmem>>, vector<8x256xf32>
    tpu.vector_store %arg4[%c0_6, %c0_7], %40 {strides = array<i32>} : memref<120x512xf32, #tpu.memory_space<vmem>>, vector<8x256xf32>,
    %42 = vector.extract_strided_slice %39 {offsets = [0, 1], sizes = [8, 256], strides = [1, 1]} : vector<8x384xf32> to vector<8x256xf32>
    %c8 = arith.constant 8 : index
    %c0_8 = arith.constant 0 : index
    %43 = vector.load %arg4[%c8, %c0_8] : memref<120x512xf32, #tpu.memory_space<vmem>>, vector<8x256xf32>
    tpu.vector_store %arg4[%c8, %c0_8], %42 {strides = array<i32>} : memref<120x512xf32, #tpu.memory_space<vmem>>, vector<8x256xf32>,
    %44 = vector.extract_strided_slice %39 {offsets = [0, 2], sizes = [8, 256], strides = [1, 1]} : vector<8x384xf32> to vector<8x256xf32>
    %c16 = arith.constant 16 : index
    %c0_9 = arith.constant 0 : index
    %45 = vector.load %arg4[%c16, %c0_9] : memref<120x512xf32, #tpu.memory_space<vmem>>, vector<8x256xf32>
    tpu.vector_store %arg4[%c16, %c0_9], %44 {strides = array<i32>} : memref<120x512xf32, #tpu.memory_space<vmem>>, vector<8x256xf32>,
    %46 = vector.extract_strided_slice %39 {offsets = [0, 12], sizes = [8, 256], strides = [1, 1]} : vector<8x384xf32> to vector<8x256xf32>
    %c24 = arith.constant 24 : index
    %c0_10 = arith.constant 0 : index
    %47 = vector.load %arg4[%c24, %c0_10] : memref<120x512xf32, #tpu.memory_space<vmem>>, vector<8x256xf32>
    tpu.vector_store %arg4[%c24, %c0_10], %46 {strides = array<i32>} : memref<120x512xf32, #tpu.memory_space<vmem>>, vector<8x256xf32>,
    %48 = vector.extract_strided_slice %39 {offsets = [0, 13], sizes = [8, 256], strides = [1, 1]} : vector<8x384xf32> to vector<8x256xf32>
    %c32 = arith.constant 32 : index
    %c0_11 = arith.constant 0 : index
    %49 = vector.load %arg4[%c32, %c0_11] : memref<120x512xf32, #tpu.memory_space<vmem>>, vector<8x256xf32>
    tpu.vector_store %arg4[%c32, %c0_11], %48 {strides = array<i32>} : memref<120x512xf32, #tpu.memory_space<vmem>>, vector<8x256xf32>,
    %50 = vector.extract_strided_slice %39 {offsets = [0, 14], sizes = [8, 256], strides = [1, 1]} : vector<8x384xf32> to vector<8x256xf32>
    %c40 = arith.constant 40 : index
    %c0_12 = arith.constant 0 : index
    %51 = vector.load %arg4[%c40, %c0_12] : memref<120x512xf32, #tpu.memory_space<vmem>>, vector<8x256xf32>
    tpu.vector_store %arg4[%c40, %c0_12], %50 {strides = array<i32>} : memref<120x512xf32, #tpu.memory_space<vmem>>, vector<8x256xf32>,
    %52 = vector.extract_strided_slice %39 {offsets = [0, 24], sizes = [8, 256], strides = [1, 1]} : vector<8x384xf32> to vector<8x256xf32>
    %c48 = arith.constant 48 : index
    %c0_13 = arith.constant 0 : index
    %53 = vector.load %arg4[%c48, %c0_13] : memref<120x512xf32, #tpu.memory_space<vmem>>, vector<8x256xf32>
    tpu.vector_store %arg4[%c48, %c0_13], %52 {strides = array<i32>} : memref<120x512xf32, #tpu.memory_space<vmem>>, vector<8x256xf32>,
    %54 = vector.extract_strided_slice %39 {offsets = [0, 25], sizes = [8, 256], strides = [1, 1]} : vector<8x384xf32> to vector<8x256xf32>
    %c56 = arith.constant 56 : index
    %c0_14 = arith.constant 0 : index
    %55 = vector.load %arg4[%c56, %c0_14] : memref<120x512xf32, #tpu.memory_space<vmem>>, vector<8x256xf32>
    tpu.vector_store %arg4[%c56, %c0_14], %54 {strides = array<i32>} : memref<120x512xf32, #tpu.memory_space<vmem>>, vector<8x256xf32>,
    %56 = vector.extract_strided_slice %39 {offsets = [0, 26], sizes = [8, 256], strides = [1, 1]} : vector<8x384xf32> to vector<8x256xf32>
    %c64 = arith.constant 64 : index
    %c0_15 = arith.constant 0 : index
    %57 = vector.load %arg4[%c64, %c0_15] : memref<120x512xf32, #tpu.memory_space<vmem>>, vector<8x256xf32>
    tpu.vector_store %arg4[%c64, %c0_15], %56 {strides = array<i32>} : memref<120x512xf32, #tpu.memory_space<vmem>>, vector<8x256xf32>,
    %58 = vector.extract_strided_slice %39 {offsets = [0, 36], sizes = [8, 256], strides = [1, 1]} : vector<8x384xf32> to vector<8x256xf32>
    %c72 = arith.constant 72 : index
    %c0_16 = arith.constant 0 : index
    %59 = vector.load %arg4[%c72, %c0_16] : memref<120x512xf32, #tpu.memory_space<vmem>>, vector<8x256xf32>
    tpu.vector_store %arg4[%c72, %c0_16], %58 {strides = array<i32>} : memref<120x512xf32, #tpu.memory_space<vmem>>, vector<8x256xf32>,
    %60 = vector.extract_strided_slice %39 {offsets = [0, 37], sizes = [8, 256], strides = [1, 1]} : vector<8x384xf32> to vector<8x256xf32>
    %c80 = arith.constant 80 : index
    %c0_17 = arith.constant 0 : index
    %61 = vector.load %arg4[%c80, %c0_17] : memref<120x512xf32, #tpu.memory_space<vmem>>, vector<8x256xf32>
    tpu.vector_store %arg4[%c80, %c0_17], %60 {strides = array<i32>} : memref<120x512xf32, #tpu.memory_space<vmem>>, vector<8x256xf32>,
    %62 = vector.extract_strided_slice %39 {offsets = [0, 38], sizes = [8, 256], strides = [1, 1]} : vector<8x384xf32> to vector<8x256xf32>
    %c88 = arith.constant 88 : index
    %c0_18 = arith.constant 0 : index
    %63 = vector.load %arg4[%c88, %c0_18] : memref<120x512xf32, #tpu.memory_space<vmem>>, vector<8x256xf32>
    tpu.vector_store %arg4[%c88, %c0_18], %62 {strides = array<i32>} : memref<120x512xf32, #tpu.memory_space<vmem>>, vector<8x256xf32>,
    %64 = vector.extract_strided_slice %39 {offsets = [0, 48], sizes = [8, 256], strides = [1, 1]} : vector<8x384xf32> to vector<8x256xf32>
    %c96 = arith.constant 96 : index
    %c0_19 = arith.constant 0 : index
    %65 = vector.load %arg4[%c96, %c0_19] : memref<120x512xf32, #tpu.memory_space<vmem>>, vector<8x256xf32>
    tpu.vector_store %arg4[%c96, %c0_19], %64 {strides = array<i32>} : memref<120x512xf32, #tpu.memory_space<vmem>>, vector<8x256xf32>,
    %66 = vector.extract_strided_slice %39 {offsets = [0, 49], sizes = [8, 256], strides = [1, 1]} : vector<8x384xf32> to vector<8x256xf32>
    %c104 = arith.constant 104 : index
    %c0_20 = arith.constant 0 : index
    %67 = vector.load %arg4[%c104, %c0_20] : memref<120x512xf32, #tpu.memory_space<vmem>>, vector<8x256xf32>
    tpu.vector_store %arg4[%c104, %c0_20], %66 {strides = array<i32>} : memref<120x512xf32, #tpu.memory_space<vmem>>, vector<8x256xf32>,
    %68 = vector.extract_strided_slice %39 {offsets = [0, 50], sizes = [8, 256], strides = [1, 1]} : vector<8x384xf32> to vector<8x256xf32>
    %c112 = arith.constant 112 : index
    %c0_21 = arith.constant 0 : index
    %69 = vector.load %arg4[%c112, %c0_21] : memref<120x512xf32, #tpu.memory_space<vmem>>, vector<8x256xf32>
    tpu.vector_store %arg4[%c112, %c0_21], %68 {strides = array<i32>} : memref<120x512xf32, #tpu.memory_space<vmem>>, vector<8x256xf32>,
    %c1 = arith.constant 1 : index
    %c0_22 = arith.constant 0 : index
    %c0_23 = arith.constant 0 : index
    %70 = vector.load %arg1[%c1, %c0_22, %c0_23] : memref<2x8x512xf32, #tpu.memory_space<vmem>>, vector<1x8x512xf32>
    %71 = vector.shape_cast %70 : vector<1x8x512xf32> to vector<8x512xf32>
    %cst_24 = arith.constant 0.000000e+00 : f32
    %72 = vector.broadcast %cst_24 : f32 to vector<8x384xf32>
    %73 = vector.extract_strided_slice %71 {offsets = [0, 48], sizes = [8, 384], strides = [1, 1]} : vector<8x512xf32> to vector<8x384xf32>
    %c50_i32_25 = arith.constant 50 : i32
    %74 = vector.broadcast %c50_i32_25 : i32 to vector<8x384xi32>
    %75 = arith.cmpi sge, %0, %74 : vector<8x384xi32>
    %c58_i32_26 = arith.constant 58 : i32
    %76 = vector.broadcast %c58_i32_26 : i32 to vector<8x384xi32>
    %77 = arith.cmpi slt, %0, %76 : vector<8x384xi32>
    %78 = arith.andi %75, %77 : vector<8x384xi1>
    %cst_27 = arith.constant 0.000000e+00 : f32
    %79 = vector.broadcast %cst_27 : f32 to vector<8x384xf32>
    %80 = arith.select %78, %73, %79 : vector<8x384xi1>, vector<8x384xf32>
    %81 = arith.addf %72, %80 : vector<8x384xf32>
    %82 = vector.extract_strided_slice %71 {offsets = [0, 32], sizes = [8, 384], strides = [1, 1]} : vector<8x512xf32> to vector<8x384xf32>
    %c74_i32_28 = arith.constant 74 : i32
    %83 = vector.broadcast %c74_i32_28 : i32 to vector<8x384xi32>
    %84 = arith.cmpi sge, %0, %83 : vector<8x384xi32>
    %c82_i32_29 = arith.constant 82 : i32
    %85 = vector.broadcast %c82_i32_29 : i32 to vector<8x384xi32>
    %86 = arith.cmpi slt, %0, %85 : vector<8x384xi32>
    %87 = arith.andi %84, %86 : vector<8x384xi1>
    %cst_30 = arith.constant 0.000000e+00 : f32
    %88 = vector.broadcast %cst_30 : f32 to vector<8x384xf32>
    %89 = arith.select %87, %82, %88 : vector<8x384xi1>, vector<8x384xf32>
    %90 = arith.addf %81, %89 : vector<8x384xf32>
    %91 = vector.extract_strided_slice %71 {offsets = [0, 16], sizes = [8, 384], strides = [1, 1]} : vector<8x512xf32> to vector<8x384xf32>
    %c98_i32_31 = arith.constant 98 : i32
    %92 = vector.broadcast %c98_i32_31 : i32 to vector<8x384xi32>
    %93 = arith.cmpi sge, %0, %92 : vector<8x384xi32>
    %c106_i32_32 = arith.constant 106 : i32
    %94 = vector.broadcast %c106_i32_32 : i32 to vector<8x384xi32>
    %95 = arith.cmpi slt, %0, %94 : vector<8x384xi32>
    %96 = arith.andi %93, %95 : vector<8x384xi1>
    %cst_33 = arith.constant 0.000000e+00 : f32
    %97 = vector.broadcast %cst_33 : f32 to vector<8x384xf32>
    %98 = arith.select %96, %91, %97 : vector<8x384xi1>, vector<8x384xf32>
    %99 = arith.addf %90, %98 : vector<8x384xf32>
    %100 = vector.extract_strided_slice %71 {offsets = [0, 0], sizes = [8, 384], strides = [1, 1]} : vector<8x512xf32> to vector<8x384xf32>
    %c122_i32_34 = arith.constant 122 : i32
    %101 = vector.broadcast %c122_i32_34 : i32 to vector<8x384xi32>
    %102 = arith.cmpi sge, %0, %101 : vector<8x384xi32>
    %c130_i32_35 = arith.constant 130 : i32
    %103 = vector.broadcast %c130_i32_35 : i32 to vector<8x384xi32>
    %104 = arith.cmpi slt, %0, %103 : vector<8x384xi32>
    %105 = arith.andi %102, %104 : vector<8x384xi1>
    %cst_36 = arith.constant 0.000000e+00 : f32
    %106 = vector.broadcast %cst_36 : f32 to vector<8x384xf32>
    %107 = arith.select %105, %100, %106 : vector<8x384xi1>, vector<8x384xf32>
    %108 = arith.addf %99, %107 : vector<8x384xf32>
    %109 = vector.extract_strided_slice %108 {offsets = [0, 0], sizes = [8, 256], strides = [1, 1]} : vector<8x384xf32> to vector<8x256xf32>
    %c0_37 = arith.constant 0 : index
    %c256 = arith.constant 256 : index
    %110 = vector.load %arg4[%c0_37, %c256] : memref<120x512xf32, #tpu.memory_space<vmem>>, vector<8x256xf32>
    tpu.vector_store %arg4[%c0_37, %c256], %109 {strides = array<i32>} : memref<120x512xf32, #tpu.memory_space<vmem>>, vector<8x256xf32>,
    %111 = vector.extract_strided_slice %108 {offsets = [0, 1], sizes = [8, 256], strides = [1, 1]} : vector<8x384xf32> to vector<8x256xf32>
    %c8_38 = arith.constant 8 : index
    %c256_39 = arith.constant 256 : index
    %112 = vector.load %arg4[%c8_38, %c256_39] : memref<120x512xf32, #tpu.memory_space<vmem>>, vector<8x256xf32>
    tpu.vector_store %arg4[%c8_38, %c256_39], %111 {strides = array<i32>} : memref<120x512xf32, #tpu.memory_space<vmem>>, vector<8x256xf32>,
    %113 = vector.extract_strided_slice %108 {offsets = [0, 2], sizes = [8, 256], strides = [1, 1]} : vector<8x384xf32> to vector<8x256xf32>
    %c16_40 = arith.constant 16 : index
    %c256_41 = arith.constant 256 : index
    %114 = vector.load %arg4[%c16_40, %c256_41] : memref<120x512xf32, #tpu.memory_space<vmem>>, vector<8x256xf32>
    tpu.vector_store %arg4[%c16_40, %c256_41], %113 {strides = array<i32>} : memref<120x512xf32, #tpu.memory_space<vmem>>, vector<8x256xf32>,
    %115 = vector.extract_strided_slice %108 {offsets = [0, 12], sizes = [8, 256], strides = [1, 1]} : vector<8x384xf32> to vector<8x256xf32>
    %c24_42 = arith.constant 24 : index
    %c256_43 = arith.constant 256 : index
    %116 = vector.load %arg4[%c24_42, %c256_43] : memref<120x512xf32, #tpu.memory_space<vmem>>, vector<8x256xf32>
    tpu.vector_store %arg4[%c24_42, %c256_43], %115 {strides = array<i32>} : memref<120x512xf32, #tpu.memory_space<vmem>>, vector<8x256xf32>,
    %117 = vector.extract_strided_slice %108 {offsets = [0, 13], sizes = [8, 256], strides = [1, 1]} : vector<8x384xf32> to vector<8x256xf32>
    %c32_44 = arith.constant 32 : index
    %c256_45 = arith.constant 256 : index
    %118 = vector.load %arg4[%c32_44, %c256_45] : memref<120x512xf32, #tpu.memory_space<vmem>>, vector<8x256xf32>
    tpu.vector_store %arg4[%c32_44, %c256_45], %117 {strides = array<i32>} : memref<120x512xf32, #tpu.memory_space<vmem>>, vector<8x256xf32>,
    %119 = vector.extract_strided_slice %108 {offsets = [0, 14], sizes = [8, 256], strides = [1, 1]} : vector<8x384xf32> to vector<8x256xf32>
    %c40_46 = arith.constant 40 : index
    %c256_47 = arith.constant 256 : index
    %120 = vector.load %arg4[%c40_46, %c256_47] : memref<120x512xf32, #tpu.memory_space<vmem>>, vector<8x256xf32>
    tpu.vector_store %arg4[%c40_46, %c256_47], %119 {strides = array<i32>} : memref<120x512xf32, #tpu.memory_space<vmem>>, vector<8x256xf32>,
    %121 = vector.extract_strided_slice %108 {offsets = [0, 24], sizes = [8, 256], strides = [1, 1]} : vector<8x384xf32> to vector<8x256xf32>
    %c48_48 = arith.constant 48 : index
    %c256_49 = arith.constant 256 : index
    %122 = vector.load %arg4[%c48_48, %c256_49] : memref<120x512xf32, #tpu.memory_space<vmem>>, vector<8x256xf32>
    tpu.vector_store %arg4[%c48_48, %c256_49], %121 {strides = array<i32>} : memref<120x512xf32, #tpu.memory_space<vmem>>, vector<8x256xf32>,
    %123 = vector.extract_strided_slice %108 {offsets = [0, 25], sizes = [8, 256], strides = [1, 1]} : vector<8x384xf32> to vector<8x256xf32>
    %c56_50 = arith.constant 56 : index
    %c256_51 = arith.constant 256 : index
    %124 = vector.load %arg4[%c56_50, %c256_51] : memref<120x512xf32, #tpu.memory_space<vmem>>, vector<8x256xf32>
    tpu.vector_store %arg4[%c56_50, %c256_51], %123 {strides = array<i32>} : memref<120x512xf32, #tpu.memory_space<vmem>>, vector<8x256xf32>,
    %125 = vector.extract_strided_slice %108 {offsets = [0, 26], sizes = [8, 256], strides = [1, 1]} : vector<8x384xf32> to vector<8x256xf32>
    %c64_52 = arith.constant 64 : index
    %c256_53 = arith.constant 256 : index
    %126 = vector.load %arg4[%c64_52, %c256_53] : memref<120x512xf32, #tpu.memory_space<vmem>>, vector<8x256xf32>
    tpu.vector_store %arg4[%c64_52, %c256_53], %125 {strides = array<i32>} : memref<120x512xf32, #tpu.memory_space<vmem>>, vector<8x256xf32>,
    %127 = vector.extract_strided_slice %108 {offsets = [0, 36], sizes = [8, 256], strides = [1, 1]} : vector<8x384xf32> to vector<8x256xf32>
    %c72_54 = arith.constant 72 : index
    %c256_55 = arith.constant 256 : index
    %128 = vector.load %arg4[%c72_54, %c256_55] : memref<120x512xf32, #tpu.memory_space<vmem>>, vector<8x256xf32>
    tpu.vector_store %arg4[%c72_54, %c256_55], %127 {strides = array<i32>} : memref<120x512xf32, #tpu.memory_space<vmem>>, vector<8x256xf32>,
    %129 = vector.extract_strided_slice %108 {offsets = [0, 37], sizes = [8, 256], strides = [1, 1]} : vector<8x384xf32> to vector<8x256xf32>
    %c80_56 = arith.constant 80 : index
    %c256_57 = arith.constant 256 : index
    %130 = vector.load %arg4[%c80_56, %c256_57] : memref<120x512xf32, #tpu.memory_space<vmem>>, vector<8x256xf32>
    tpu.vector_store %arg4[%c80_56, %c256_57], %129 {strides = array<i32>} : memref<120x512xf32, #tpu.memory_space<vmem>>, vector<8x256xf32>,
    %131 = vector.extract_strided_slice %108 {offsets = [0, 38], sizes = [8, 256], strides = [1, 1]} : vector<8x384xf32> to vector<8x256xf32>
    %c88_58 = arith.constant 88 : index
    %c256_59 = arith.constant 256 : index
    %132 = vector.load %arg4[%c88_58, %c256_59] : memref<120x512xf32, #tpu.memory_space<vmem>>, vector<8x256xf32>
    tpu.vector_store %arg4[%c88_58, %c256_59], %131 {strides = array<i32>} : memref<120x512xf32, #tpu.memory_space<vmem>>, vector<8x256xf32>,
    %133 = vector.extract_strided_slice %108 {offsets = [0, 48], sizes = [8, 256], strides = [1, 1]} : vector<8x384xf32> to vector<8x256xf32>
    %c96_60 = arith.constant 96 : index
    %c256_61 = arith.constant 256 : index
    %134 = vector.load %arg4[%c96_60, %c256_61] : memref<120x512xf32, #tpu.memory_space<vmem>>, vector<8x256xf32>
    tpu.vector_store %arg4[%c96_60, %c256_61], %133 {strides = array<i32>} : memref<120x512xf32, #tpu.memory_space<vmem>>, vector<8x256xf32>,
    %135 = vector.extract_strided_slice %108 {offsets = [0, 49], sizes = [8, 256], strides = [1, 1]} : vector<8x384xf32> to vector<8x256xf32>
    %c104_62 = arith.constant 104 : index
    %c256_63 = arith.constant 256 : index
    %136 = vector.load %arg4[%c104_62, %c256_63] : memref<120x512xf32, #tpu.memory_space<vmem>>, vector<8x256xf32>
    tpu.vector_store %arg4[%c104_62, %c256_63], %135 {strides = array<i32>} : memref<120x512xf32, #tpu.memory_space<vmem>>, vector<8x256xf32>,
    %137 = vector.extract_strided_slice %108 {offsets = [0, 50], sizes = [8, 256], strides = [1, 1]} : vector<8x384xf32> to vector<8x256xf32>
    %c112_64 = arith.constant 112 : index
    %c256_65 = arith.constant 256 : index
    %138 = vector.load %arg4[%c112_64, %c256_65] : memref<120x512xf32, #tpu.memory_space<vmem>>, vector<8x256xf32>
    tpu.vector_store %arg4[%c112_64, %c256_65], %137 {strides = array<i32>} : memref<120x512xf32, #tpu.memory_space<vmem>>, vector<8x256xf32>,
    %c0_66 = arith.constant 0 : index
    %c0_67 = arith.constant 0 : index
    %139 = vector.load %arg2[%c0_66, %c0_67] : memref<12x120xf32, #tpu.memory_space<vmem>>, vector<12x120xf32>
    %c0_68 = arith.constant 0 : index
    %c0_69 = arith.constant 0 : index
    %140 = vector.load %arg4[%c0_68, %c0_69] : memref<120x512xf32, #tpu.memory_space<vmem>>, vector<120x512xf32>
    %cst_70 = arith.constant dense<0.000000e+00> : vector<12x512xf32>
    %141 = tpu.matmul %139, %140, %cst_70 {dimension_numbers = #tpu.dot_dimension_numbers<[1], [0], [0], [1], [0, 0, 1, 1], [], []>} : vector<12x120xf32>, vector<120x512xf32>, vector<12x512xf32> -> vector<12x512xf32>
    %142 = vector.extract_strided_slice %141 {offsets = [0, 0], sizes = [12, 256], strides = [1, 1]} : vector<12x512xf32> to vector<12x256xf32>
    %143 = arith.negf %142 : vector<12x256xf32>
    %144 = math.exp %143 : vector<12x256xf32>
    %cst_71 = arith.constant 1.000000e+00 : f32
    %145 = vector.broadcast %cst_71 : f32 to vector<12x256xf32>
    %146 = arith.addf %145, %144 : vector<12x256xf32>
    %147 = arith.divf %145, %146 : vector<12x256xf32>
    %c0_72 = arith.constant 0 : index
    %c0_73 = arith.constant 0 : index
    %c0_74 = arith.constant 0 : index
    %148 = vector.load %arg3[%c0_72, %c0_73, %c0_74] : memref<2x12x256xf32, #tpu.memory_space<vmem>>, vector<1x12x256xf32>
    %149 = vector.shape_cast %148 : vector<1x12x256xf32> to vector<12x256xf32>
    %150 = vector.shape_cast %147 : vector<12x256xf32> to vector<1x12x256xf32>
    tpu.vector_store %arg3[%c0_72, %c0_73, %c0_74], %150 {strides = array<i32>} : memref<2x12x256xf32, #tpu.memory_space<vmem>>, vector<1x12x256xf32>,
    %151 = vector.extract_strided_slice %141 {offsets = [0, 256], sizes = [12, 256], strides = [1, 1]} : vector<12x512xf32> to vector<12x256xf32>
    %152 = arith.negf %151 : vector<12x256xf32>
    %153 = math.exp %152 : vector<12x256xf32>
    %cst_75 = arith.constant 1.000000e+00 : f32
    %154 = vector.broadcast %cst_75 : f32 to vector<12x256xf32>
    %155 = arith.addf %154, %153 : vector<12x256xf32>
    %156 = arith.divf %154, %155 : vector<12x256xf32>
    %c1_76 = arith.constant 1 : index
    %c0_77 = arith.constant 0 : index
    %c0_78 = arith.constant 0 : index
    %157 = vector.load %arg3[%c1_76, %c0_77, %c0_78] : memref<2x12x256xf32, #tpu.memory_space<vmem>>, vector<1x12x256xf32>
    %158 = vector.shape_cast %157 : vector<1x12x256xf32> to vector<12x256xf32>
    %159 = vector.shape_cast %156 : vector<12x256xf32> to vector<1x12x256xf32>
    tpu.vector_store %arg3[%c1_76, %c0_77, %c0_78], %159 {strides = array<i32>} : memref<2x12x256xf32, #tpu.memory_space<vmem>>, vector<1x12x256xf32>,
    return
  }
  func.func @transform_0(%arg0: i32) -> (i32, i32, i32) {
    %c0_i32 = arith.constant 0 : i32
    %c0_i32_0 = arith.constant 0 : i32
    %c0_i32_1 = arith.constant 0 : i32
    %c0_i32_2 = arith.constant 0 : i32
    return %c0_i32, %c0_i32_0, %c0_i32_1 : i32, i32, i32
  }
  func.func @transform_1(%arg0: i32) -> (i32, i32) {
    %c0_i32 = arith.constant 0 : i32
    %c0_i32_0 = arith.constant 0 : i32
    %c0_i32_1 = arith.constant 0 : i32
    return %c0_i32, %c0_i32_0 : i32, i32
  }
  func.func @transform_2(%arg0: i32) -> (i32, i32, i32) {
    %c0_i32 = arith.constant 0 : i32
    %c0_i32_0 = arith.constant 0 : i32
    %c0_i32_1 = arith.constant 0 : i32
    %c0_i32_2 = arith.constant 0 : i32
    return %c0_i32, %c0_i32_0, %c0_i32_1 : i32, i32, i32
  }
}

</mosaic_0001>

<llo_original>
// kernel: conv_transpose_sigmoid.1
$region0: #{conv_transpose_sigmoid.1}
  #allocation0 [shape = 'u32[]', space=smem, size = 0x4, offset = 0x4, fixed_abs, tag = 'smem constant byte address 0x4 - core index']
  #allocation1 [shape = 'u32[144,128]{1,0:T(1,128)}', space=vmem, size = 0x12000, scoped, tag = 'internal scratch']
  #allocation2 [shape = 'f32[120,512]{1,0:T(8,128)}', space=vmem, size = 0x3c000, scoped, tag = 'scratch operand']
  %s0 = inlined_call_operand.vmem [shape: f32[2,8,512], index: 0, kind: input, shape index: {}]
  %s1 = inlined_call_operand.vmem [shape: f32[12,120], index: 1, kind: input, shape index: {}]
  %s2 = inlined_call_operand.vmem [shape: f32[2,12,256], index: 2, kind: output, shape index: {}]
  %s3 = sld [smem:[#allocation0]]
  $region18: #{conv_transpose_sigmoid.1} parent=0
    _
  %s5 = ssub.s32 1, %s3
  %s6 = scalar_select 0, %s5, %s3
  // Predicated region
  $region2: #{conv_transpose_sigmoid.1} parent=0 // pred_check
    _
  $region3: #{conv_transpose_sigmoid.1} parent=0 // pred_check_branch
    %8 = sbr.rel (0) target = $region5
  $region4: #{conv_transpose_sigmoid.1} parent=0 // pred_region
    _
  $region5: #{conv_transpose_sigmoid.1} parent=0 // pred_fallthru
    _
  // Predicated region
  $region6: #{conv_transpose_sigmoid.1} parent=0 // pred_check
    _
  $region7: #{conv_transpose_sigmoid.1} parent=0 // pred_check_branch
    %10 = sbr.rel (0) target = $region9
  $region8: #{conv_transpose_sigmoid.1} parent=0 // pred_region
    _
  $region9: #{conv_transpose_sigmoid.1} parent=0 // pred_fallthru
    _
  %v11 = vlaneseq
  %v12 = vand.u32 %v11, 127
  %v13 = vadd.s32 %v12, 128
  %v14 = vadd.s32 %v12, 256
  %v15 = vld [vmem:[%s0] sm:$0xff]
  %v16 = vld [vmem:[%s0 + $0x8] sm:$0xff]
  %v17 = vld [vmem:[%s0 + $0x10] sm:$0xff]
  %v18 = vld [vmem:[%s0 + $0x18] sm:$0xff]
  %vm19 = vcmp.ge.s32.totalorder %v12, 50
  %vm20 = vcmp.ge.s32.totalorder %v13, 50
  %vm21 = vcmp.ge.s32.totalorder %v14, 50
  %vm22 = vcmp.lt.s32.totalorder %v12, 58
  %vm23 = vcmp.lt.s32.totalorder %v13, 58
  %vm24 = vcmp.lt.s32.totalorder %v14, 58
  %vm25 = vmand %vm19, %vm22
  %vm26 = vmand %vm20, %vm23
  %vm27 = vmand %vm21, %vm24
  %32 = vrot.lane.b32.xlu0 %v15, 80
  %v33 = vpop.permute.xlu0 %32
  %34 = vrot.lane.b32.xlu0 %v16, 80
  %v35 = vpop.permute.xlu0 %34
  %36 = vrot.lane.b32.xlu0 %v17, 80
  %v37 = vpop.permute.xlu0 %36
  %38 = vrot.lane.b32.xlu0 %v18, 80
  %v39 = vpop.permute.xlu0 %38
  %vm40 = vcmask 654336
  %v41 = vsel %vm40, %v33, %v35
  %v42 = vsel %vm40, %v35, %v37
  %v43 = vsel %vm40, %v37, %v39
  %v47 = vsel %vm25, %v41, 0.0
  %v48 = vsel %vm26, %v42, 0.0
  %v49 = vsel %vm27, %v43, 0.0
  %v50 = vadd.f32 %v47, 0.0
  %v51 = vadd.f32 %v48, 0.0
  %v52 = vadd.f32 %v49, 0.0
  %vm53 = vcmp.ge.s32.totalorder %v12, 74
  %vm54 = vcmp.ge.s32.totalorder %v13, 74
  %vm55 = vcmp.ge.s32.totalorder %v14, 74
  %vm56 = vcmp.lt.s32.totalorder %v12, 82
  %vm57 = vcmp.lt.s32.totalorder %v13, 82
  %vm58 = vcmp.lt.s32.totalorder %v14, 82
  %vm59 = vmand %vm53, %vm56
  %vm60 = vmand %vm54, %vm57
  %vm61 = vmand %vm55, %vm58
  %62 = vrot.lane.b32.xlu0 %v15, 96
  %v63 = vpop.permute.xlu0 %62
  %64 = vrot.lane.b32.xlu0 %v16, 96
  %v65 = vpop.permute.xlu0 %64
  %66 = vrot.lane.b32.xlu0 %v17, 96
  %v67 = vpop.permute.xlu0 %66
  %68 = vrot.lane.b32.xlu0 %v18, 96
  %v69 = vpop.permute.xlu0 %68
  %vm70 = vcmask 785408
  %v71 = vsel %vm70, %v63, %v65
  %v72 = vsel %vm70, %v65, %v67
  %v73 = vsel %vm70, %v67, %v69
  %v77 = vsel %vm59, %v71, 0.0
  %v78 = vsel %vm60, %v72, 0.0
  %v79 = vsel %vm61, %v73, 0.0
  %v80 = vadd.f32 %v50, %v77
  %v81 = vadd.f32 %v51, %v78
  %v82 = vadd.f32 %v52, %v79
  %vm83 = vcmp.ge.s32.totalorder %v12, 98
  %vm84 = vcmp.ge.s32.totalorder %v13, 98
  %vm85 = vcmp.ge.s32.totalorder %v14, 98
  %vm86 = vcmp.lt.s32.totalorder %v12, 106
  %vm87 = vcmp.lt.s32.totalorder %v13, 106
  %vm88 = vcmp.lt.s32.totalorder %v14, 106
  %vm89 = vmand %vm83, %vm86
  %vm90 = vmand %vm84, %vm87
  %vm91 = vmand %vm85, %vm88
  %92 = vrot.lane.b32.xlu0 %v15, 112
  %v93 = vpop.permute.xlu0 %92
  %94 = vrot.lane.b32.xlu0 %v16, 112
  %v95 = vpop.permute.xlu0 %94
  %96 = vrot.lane.b32.xlu0 %v17, 112
  %v97 = vpop.permute.xlu0 %96
  %98 = vrot.lane.b32.xlu0 %v18, 112
  %v99 = vpop.permute.xlu0 %98
  %vm100 = vcmask 916480
  %v101 = vsel %vm100, %v93, %v95
  %v102 = vsel %vm100, %v95, %v97
  %v103 = vsel %vm100, %v97, %v99
  %v107 = vsel %vm89, %v101, 0.0
  %v108 = vsel %vm90, %v102, 0.0
  %v109 = vsel %vm91, %v103, 0.0
  %v110 = vadd.f32 %v80, %v107
  %v111 = vadd.f32 %v81, %v108
  %v112 = vadd.f32 %v82, %v109
  %vm113 = vcmp.ge.s32.totalorder %v12, 122
  %vm114 = vcmp.ge.s32.totalorder %v13, 122
  %vm115 = vcmp.ge.s32.totalorder %v14, 122
  %vm116 = vcmp.lt.s32.totalorder %v12, 130
  %vm117 = vcmp.lt.s32.totalorder %v13, 130
  %vm118 = vcmp.lt.s32.totalorder %v14, 130
  %vm119 = vmand %vm113, %vm116
  %vm120 = vmand %vm114, %vm117
  %vm121 = vmand %vm115, %vm118
  %v122 = vsel %vm119, %v15, 0.0
  %v123 = vsel %vm120, %v16, 0.0
  %v124 = vsel %vm121, %v17, 0.0
  %v125 = vadd.f32 %v110, %v122
  %v126 = vadd.f32 %v111, %v123
  %v127 = vadd.f32 %v112, %v124
  %128 = vst [vmem:[#allocation2] sm:$0xff] %v125
  %129 = vst [vmem:[#allocation2 + $0x8] sm:$0xff] %v126
  %133 = vrot.lane.b32.xlu0 %v125, 127
  %v134 = vpop.permute.xlu0 %133
  %135 = vrot.lane.b32.xlu0 %v126, 127
  %v136 = vpop.permute.xlu0 %135
  %137 = vrot.lane.b32.xlu0 %v127, 127
  %v138 = vpop.permute.xlu0 %137
  %vm139 = vcmask 1039360
  %v140 = vsel %vm139, %v134, %v136
  %v141 = vsel %vm139, %v136, %v138
  %144 = vst [vmem:[#allocation2 + $0x20] sm:$0xff] %v140
  %145 = vst [vmem:[#allocation2 + $0x28] sm:$0xff] %v141
  %146 = vrot.lane.b32.xlu0 %v125, 126
  %v147 = vpop.permute.xlu0 %146
  %148 = vrot.lane.b32.xlu0 %v126, 126
  %v149 = vpop.permute.xlu0 %148
  %150 = vrot.lane.b32.xlu0 %v127, 126
  %v151 = vpop.permute.xlu0 %150
  %vm152 = vcmask 1031168
  %v153 = vsel %vm152, %v147, %v149
  %v154 = vsel %vm152, %v149, %v151
  %157 = vst [vmem:[#allocation2 + $0x40] sm:$0xff] %v153
  %158 = vst [vmem:[#allocation2 + $0x48] sm:$0xff] %v154
  %159 = vrot.lane.b32.xlu0 %v125, 116
  %v160 = vpop.permute.xlu0 %159
  %161 = vrot.lane.b32.xlu0 %v126, 116
  %v162 = vpop.permute.xlu0 %161
  %163 = vrot.lane.b32.xlu0 %v127, 116
  %v164 = vpop.permute.xlu0 %163
  %vm165 = vcmask 949248
  %v166 = vsel %vm165, %v160, %v162
  %v167 = vsel %vm165, %v162, %v164
  %170 = vst [vmem:[#allocation2 + $0x60] sm:$0xff] %v166
  %171 = vst [vmem:[#allocation2 + $0x68] sm:$0xff] %v167
  %172 = vrot.lane.b32.xlu0 %v125, 115
  %v173 = vpop.permute.xlu0 %172
  %174 = vrot.lane.b32.xlu0 %v126, 115
  %v175 = vpop.permute.xlu0 %174
  %176 = vrot.lane.b32.xlu0 %v127, 115
  %v177 = vpop.permute.xlu0 %176
  %vm178 = vcmask 941056
  %v179 = vsel %vm178, %v173, %v175
  %v180 = vsel %vm178, %v175, %v177
  %183 = vst [vmem:[#allocation2 + $0x80] sm:$0xff] %v179
  %184 = vst [vmem:[#allocation2 + $0x88] sm:$0xff] %v180
  %185 = vrot.lane.b32.xlu0 %v125, 114
  %v186 = vpop.permute.xlu0 %185
  %187 = vrot.lane.b32.xlu0 %v126, 114
  %v188 = vpop.permute.xlu0 %187
  %189 = vrot.lane.b32.xlu0 %v127, 114
  %v190 = vpop.permute.xlu0 %189
  %vm191 = vcmask 932864
  %v192 = vsel %vm191, %v186, %v188
  %v193 = vsel %vm191, %v188, %v190
  %196 = vst [vmem:[#allocation2 + $0xa0] sm:$0xff] %v192
  %197 = vst [vmem:[#allocation2 + $0xa8] sm:$0xff] %v193
  %198 = vrot.lane.b32.xlu0 %v125, 104
  %v199 = vpop.permute.xlu0 %198
  %200 = vrot.lane.b32.xlu0 %v126, 104
  %v201 = vpop.permute.xlu0 %200
  %202 = vrot.lane.b32.xlu0 %v127, 104
  %v203 = vpop.permute.xlu0 %202
  %vm204 = vcmask 850944
  %v205 = vsel %vm204, %v199, %v201
  %v206 = vsel %vm204, %v201, %v203
  %209 = vst [vmem:[#allocation2 + $0xc0] sm:$0xff] %v205
  %210 = vst [vmem:[#allocation2 + $0xc8] sm:$0xff] %v206
  %211 = vrot.lane.b32.xlu0 %v125, 103
  %v212 = vpop.permute.xlu0 %211
  %213 = vrot.lane.b32.xlu0 %v126, 103
  %v214 = vpop.permute.xlu0 %213
  %215 = vrot.lane.b32.xlu0 %v127, 103
  %v216 = vpop.permute.xlu0 %215
  %vm217 = vcmask 842752
  %v218 = vsel %vm217, %v212, %v214
  %v219 = vsel %vm217, %v214, %v216
  %222 = vst [vmem:[#allocation2 + $0xe0] sm:$0xff] %v218
  %223 = vst [vmem:[#allocation2 + $0xe8] sm:$0xff] %v219
  %224 = vrot.lane.b32.xlu0 %v125, 102
  %v225 = vpop.permute.xlu0 %224
  %226 = vrot.lane.b32.xlu0 %v126, 102
  %v227 = vpop.permute.xlu0 %226
  %228 = vrot.lane.b32.xlu0 %v127, 102
  %v229 = vpop.permute.xlu0 %228
  %vm230 = vcmask 834560
  %v231 = vsel %vm230, %v225, %v227
  %v232 = vsel %vm230, %v227, %v229
  %235 = vst [vmem:[#allocation2 + $0x100] sm:$0xff] %v231
  %236 = vst [vmem:[#allocation2 + $0x108] sm:$0xff] %v232
  %237 = vrot.lane.b32.xlu0 %v125, 92
  %v238 = vpop.permute.xlu0 %237
  %239 = vrot.lane.b32.xlu0 %v126, 92
  %v240 = vpop.permute.xlu0 %239
  %241 = vrot.lane.b32.xlu0 %v127, 92
  %v242 = vpop.permute.xlu0 %241
  %vm243 = vcmask 752640
  %v244 = vsel %vm243, %v238, %v240
  %v245 = vsel %vm243, %v240, %v242
  %248 = vst [vmem:[#allocation2 + $0x120] sm:$0xff] %v244
  %249 = vst [vmem:[#allocation2 + $0x128] sm:$0xff] %v245
  %250 = vrot.lane.b32.xlu0 %v125, 91
  %v251 = vpop.permute.xlu0 %250
  %252 = vrot.lane.b32.xlu0 %v126, 91
  %v253 = vpop.permute.xlu0 %252
  %254 = vrot.lane.b32.xlu0 %v127, 91
  %v255 = vpop.permute.xlu0 %254
  %vm256 = vcmask 744448
  %v257 = vsel %vm256, %v251, %v253
  %v258 = vsel %vm256, %v253, %v255
  %261 = vst [vmem:[#allocation2 + $0x140] sm:$0xff] %v257
  %262 = vst [vmem:[#allocation2 + $0x148] sm:$0xff] %v258
  %263 = vrot.lane.b32.xlu0 %v125, 90
  %v264 = vpop.permute.xlu0 %263
  %265 = vrot.lane.b32.xlu0 %v126, 90
  %v266 = vpop.permute.xlu0 %265
  %267 = vrot.lane.b32.xlu0 %v127, 90
  %v268 = vpop.permute.xlu0 %267
  %vm269 = vcmask 736256
  %v270 = vsel %vm269, %v264, %v266
  %v271 = vsel %vm269, %v266, %v268
  %274 = vst [vmem:[#allocation2 + $0x160] sm:$0xff] %v270
  %275 = vst [vmem:[#allocation2 + $0x168] sm:$0xff] %v271
  %276 = vrot.lane.b32.xlu0 %v125, 80
  %v277 = vpop.permute.xlu0 %276
  %278 = vrot.lane.b32.xlu0 %v126, 80
  %v279 = vpop.permute.xlu0 %278
  %280 = vrot.lane.b32.xlu0 %v127, 80
  %v281 = vpop.permute.xlu0 %280
  %v282 = vsel %vm40, %v277, %v279
  %v283 = vsel %vm40, %v279, %v281
  %286 = vst [vmem:[#allocation2 + $0x180] sm:$0xff] %v282
  %287 = vst [vmem:[#allocation2 + $0x188] sm:$0xff] %v283
  %288 = vrot.lane.b32.xlu0 %v125, 79
  %v289 = vpop.permute.xlu0 %288
  %290 = vrot.lane.b32.xlu0 %v126, 79
  %v291 = vpop.permute.xlu0 %290
  %292 = vrot.lane.b32.xlu0 %v127, 79
  %v293 = vpop.permute.xlu0 %292
  %vm294 = vcmask 646144
  %v295 = vsel %vm294, %v289, %v291
  %v296 = vsel %vm294, %v291, %v293
  %299 = vst [vmem:[#allocation2 + $0x1a0] sm:$0xff] %v295
  %300 = vst [vmem:[#allocation2 + $0x1a8] sm:$0xff] %v296
  %301 = vrot.lane.b32.xlu0 %v125, 78
  %v302 = vpop.permute.xlu0 %301
  %303 = vrot.lane.b32.xlu0 %v126, 78
  %v304 = vpop.permute.xlu0 %303
  %305 = vrot.lane.b32.xlu0 %v127, 78
  %v306 = vpop.permute.xlu0 %305
  %vm307 = vcmask 637952
  %v308 = vsel %vm307, %v302, %v304
  %v309 = vsel %vm307, %v304, %v306
  %312 = vst [vmem:[#allocation2 + $0x1c0] sm:$0xff] %v308
  %313 = vst [vmem:[#allocation2 + $0x1c8] sm:$0xff] %v309
  %s314 = scalar_lea.vmem %s0, 32
  %v315 = vld [vmem:[%s314] sm:$0xff]
  %v316 = vld [vmem:[%s314 + $0x8] sm:$0xff]
  %v317 = vld [vmem:[%s314 + $0x10] sm:$0xff]
  %v318 = vld [vmem:[%s314 + $0x18] sm:$0xff]
  %323 = vrot.lane.b32.xlu0 %v315, 80
  %v324 = vpop.permute.xlu0 %323
  %325 = vrot.lane.b32.xlu0 %v316, 80
  %v326 = vpop.permute.xlu0 %325
  %327 = vrot.lane.b32.xlu0 %v317, 80
  %v328 = vpop.permute.xlu0 %327
  %329 = vrot.lane.b32.xlu0 %v318, 80
  %v330 = vpop.permute.xlu0 %329
  %v331 = vsel %vm40, %v324, %v326
  %v332 = vsel %vm40, %v326, %v328
  %v333 = vsel %vm40, %v328, %v330
  %v337 = vsel %vm25, %v331, 0.0
  %v338 = vsel %vm26, %v332, 0.0
  %v339 = vsel %vm27, %v333, 0.0
  %v340 = vadd.f32 %v337, 0.0
  %v341 = vadd.f32 %v338, 0.0
  %v342 = vadd.f32 %v339, 0.0
  %343 = vrot.lane.b32.xlu0 %v315, 96
  %v344 = vpop.permute.xlu0 %343
  %345 = vrot.lane.b32.xlu0 %v316, 96
  %v346 = vpop.permute.xlu0 %345
  %347 = vrot.lane.b32.xlu0 %v317, 96
  %v348 = vpop.permute.xlu0 %347
  %349 = vrot.lane.b32.xlu0 %v318, 96
  %v350 = vpop.permute.xlu0 %349
  %v351 = vsel %vm70, %v344, %v346
  %v352 = vsel %vm70, %v346, %v348
  %v353 = vsel %vm70, %v348, %v350
  %v357 = vsel %vm59, %v351, 0.0
  %v358 = vsel %vm60, %v352, 0.0
  %v359 = vsel %vm61, %v353, 0.0
  %v360 = vadd.f32 %v340, %v357
  %v361 = vadd.f32 %v341, %v358
  %v362 = vadd.f32 %v342, %v359
  %363 = vrot.lane.b32.xlu0 %v315, 112
  %v364 = vpop.permute.xlu0 %363
  %365 = vrot.lane.b32.xlu0 %v316, 112
  %v366 = vpop.permute.xlu0 %365
  %367 = vrot.lane.b32.xlu0 %v317, 112
  %v368 = vpop.permute.xlu0 %367
  %369 = vrot.lane.b32.xlu0 %v318, 112
  %v370 = vpop.permute.xlu0 %369
  %v371 = vsel %vm100, %v364, %v366
  %v372 = vsel %vm100, %v366, %v368
  %v373 = vsel %vm100, %v368, %v370
  %v377 = vsel %vm89, %v371, 0.0
  %v378 = vsel %vm90, %v372, 0.0
  %v379 = vsel %vm91, %v373, 0.0
  %v380 = vadd.f32 %v360, %v377
  %v381 = vadd.f32 %v361, %v378
  %v382 = vadd.f32 %v362, %v379
  %v383 = vsel %vm119, %v315, 0.0
  %v384 = vsel %vm120, %v316, 0.0
  %v385 = vsel %vm121, %v317, 0.0
  %v386 = vadd.f32 %v380, %v383
  %v387 = vadd.f32 %v381, %v384
  %v388 = vadd.f32 %v382, %v385
  %389 = vst [vmem:[#allocation2 + $0x10] sm:$0xff] %v386
  %390 = vst [vmem:[#allocation2 + $0x18] sm:$0xff] %v387
  %394 = vrot.lane.b32.xlu0 %v386, 127
  %v395 = vpop.permute.xlu0 %394
  %396 = vrot.lane.b32.xlu0 %v387, 127
  %v397 = vpop.permute.xlu0 %396
  %398 = vrot.lane.b32.xlu0 %v388, 127
  %v399 = vpop.permute.xlu0 %398
  %v400 = vsel %vm139, %v395, %v397
  %v401 = vsel %vm139, %v397, %v399
  %404 = vst [vmem:[#allocation2 + $0x30] sm:$0xff] %v400
  %405 = vst [vmem:[#allocation2 + $0x38] sm:$0xff] %v401
  %406 = vrot.lane.b32.xlu0 %v386, 126
  %v407 = vpop.permute.xlu0 %406
  %408 = vrot.lane.b32.xlu0 %v387, 126
  %v409 = vpop.permute.xlu0 %408
  %410 = vrot.lane.b32.xlu0 %v388, 126
  %v411 = vpop.permute.xlu0 %410
  %v412 = vsel %vm152, %v407, %v409
  %v413 = vsel %vm152, %v409, %v411
  %416 = vst [vmem:[#allocation2 + $0x50] sm:$0xff] %v412
  %417 = vst [vmem:[#allocation2 + $0x58] sm:$0xff] %v413
  %418 = vrot.lane.b32.xlu0 %v386, 116
  %v419 = vpop.permute.xlu0 %418
  %420 = vrot.lane.b32.xlu0 %v387, 116
  %v421 = vpop.permute.xlu0 %420
  %422 = vrot.lane.b32.xlu0 %v388, 116
  %v423 = vpop.permute.xlu0 %422
  %v424 = vsel %vm165, %v419, %v421
  %v425 = vsel %vm165, %v421, %v423
  %428 = vst [vmem:[#allocation2 + $0x70] sm:$0xff] %v424
  %429 = vst [vmem:[#allocation2 + $0x78] sm:$0xff] %v425
  %430 = vrot.lane.b32.xlu0 %v386, 115
  %v431 = vpop.permute.xlu0 %430
  %432 = vrot.lane.b32.xlu0 %v387, 115
  %v433 = vpop.permute.xlu0 %432
  %434 = vrot.lane.b32.xlu0 %v388, 115
  %v435 = vpop.permute.xlu0 %434
  %v436 = vsel %vm178, %v431, %v433
  %v437 = vsel %vm178, %v433, %v435
  %440 = vst [vmem:[#allocation2 + $0x90] sm:$0xff] %v436
  %441 = vst [vmem:[#allocation2 + $0x98] sm:$0xff] %v437
  %442 = vrot.lane.b32.xlu0 %v386, 114
  %v443 = vpop.permute.xlu0 %442
  %444 = vrot.lane.b32.xlu0 %v387, 114
  %v445 = vpop.permute.xlu0 %444
  %446 = vrot.lane.b32.xlu0 %v388, 114
  %v447 = vpop.permute.xlu0 %446
  %v448 = vsel %vm191, %v443, %v445
  %v449 = vsel %vm191, %v445, %v447
  %452 = vst [vmem:[#allocation2 + $0xb0] sm:$0xff] %v448
  %453 = vst [vmem:[#allocation2 + $0xb8] sm:$0xff] %v449
  %454 = vrot.lane.b32.xlu0 %v386, 104
  %v455 = vpop.permute.xlu0 %454
  %456 = vrot.lane.b32.xlu0 %v387, 104
  %v457 = vpop.permute.xlu0 %456
  %458 = vrot.lane.b32.xlu0 %v388, 104
  %v459 = vpop.permute.xlu0 %458
  %v460 = vsel %vm204, %v455, %v457
  %v461 = vsel %vm204, %v457, %v459
  %464 = vst [vmem:[#allocation2 + $0xd0] sm:$0xff] %v460
  %465 = vst [vmem:[#allocation2 + $0xd8] sm:$0xff] %v461
  %466 = vrot.lane.b32.xlu0 %v386, 103
  %v467 = vpop.permute.xlu0 %466
  %468 = vrot.lane.b32.xlu0 %v387, 103
  %v469 = vpop.permute.xlu0 %468
  %470 = vrot.lane.b32.xlu0 %v388, 103
  %v471 = vpop.permute.xlu0 %470
  %v472 = vsel %vm217, %v467, %v469
  %v473 = vsel %vm217, %v469, %v471
  %476 = vst [vmem:[#allocation2 + $0xf0] sm:$0xff] %v472
  %477 = vst [vmem:[#allocation2 + $0xf8] sm:$0xff] %v473
  %478 = vrot.lane.b32.xlu0 %v386, 102
  %v479 = vpop.permute.xlu0 %478
  %480 = vrot.lane.b32.xlu0 %v387, 102
  %v481 = vpop.permute.xlu0 %480
  %482 = vrot.lane.b32.xlu0 %v388, 102
  %v483 = vpop.permute.xlu0 %482
  %v484 = vsel %vm230, %v479, %v481
  %v485 = vsel %vm230, %v481, %v483
  %488 = vst [vmem:[#allocation2 + $0x110] sm:$0xff] %v484
  %489 = vst [vmem:[#allocation2 + $0x118] sm:$0xff] %v485
  %490 = vrot.lane.b32.xlu0 %v386, 92
  %v491 = vpop.permute.xlu0 %490
  %492 = vrot.lane.b32.xlu0 %v387, 92
  %v493 = vpop.permute.xlu0 %492
  %494 = vrot.lane.b32.xlu0 %v388, 92
  %v495 = vpop.permute.xlu0 %494
  %v496 = vsel %vm243, %v491, %v493
  %v497 = vsel %vm243, %v493, %v495
  %500 = vst [vmem:[#allocation2 + $0x130] sm:$0xff] %v496
  %501 = vst [vmem:[#allocation2 + $0x138] sm:$0xff] %v497
  %502 = vrot.lane.b32.xlu0 %v386, 91
  %v503 = vpop.permute.xlu0 %502
  %504 = vrot.lane.b32.xlu0 %v387, 91
  %v505 = vpop.permute.xlu0 %504
  %506 = vrot.lane.b32.xlu0 %v388, 91
  %v507 = vpop.permute.xlu0 %506
  %v508 = vsel %vm256, %v503, %v505
  %v509 = vsel %vm256, %v505, %v507
  %512 = vst [vmem:[#allocation2 + $0x150] sm:$0xff] %v508
  %513 = vst [vmem:[#allocation2 + $0x158] sm:$0xff] %v509
  %514 = vrot.lane.b32.xlu0 %v386, 90
  %v515 = vpop.permute.xlu0 %514
  %516 = vrot.lane.b32.xlu0 %v387, 90
  %v517 = vpop.permute.xlu0 %516
  %518 = vrot.lane.b32.xlu0 %v388, 90
  %v519 = vpop.permute.xlu0 %518
  %v520 = vsel %vm269, %v515, %v517
  %v521 = vsel %vm269, %v517, %v519
  %524 = vst [vmem:[#allocation2 + $0x170] sm:$0xff] %v520
  %525 = vst [vmem:[#allocation2 + $0x178] sm:$0xff] %v521
  %526 = vrot.lane.b32.xlu0 %v386, 80
  %v527 = vpop.permute.xlu0 %526
  %528 = vrot.lane.b32.xlu0 %v387, 80
  %v529 = vpop.permute.xlu0 %528
  %530 = vrot.lane.b32.xlu0 %v388, 80
  %v531 = vpop.permute.xlu0 %530
  %v532 = vsel %vm40, %v527, %v529
  %v533 = vsel %vm40, %v529, %v531
  %536 = vst [vmem:[#allocation2 + $0x190] sm:$0xff] %v532
  %537 = vst [vmem:[#allocation2 + $0x198] sm:$0xff] %v533
  %538 = vrot.lane.b32.xlu0 %v386, 79
  %v539 = vpop.permute.xlu0 %538
  %540 = vrot.lane.b32.xlu0 %v387, 79
  %v541 = vpop.permute.xlu0 %540
  %542 = vrot.lane.b32.xlu0 %v388, 79
  %v543 = vpop.permute.xlu0 %542
  %v544 = vsel %vm294, %v539, %v541
  %v545 = vsel %vm294, %v541, %v543
  %548 = vst [vmem:[#allocation2 + $0x1b0] sm:$0xff] %v544
  %549 = vst [vmem:[#allocation2 + $0x1b8] sm:$0xff] %v545
  %550 = vrot.lane.b32.xlu0 %v386, 78
  %v551 = vpop.permute.xlu0 %550
  %552 = vrot.lane.b32.xlu0 %v387, 78
  %v553 = vpop.permute.xlu0 %552
  %554 = vrot.lane.b32.xlu0 %v388, 78
  %v555 = vpop.permute.xlu0 %554
  %v556 = vsel %vm307, %v551, %v553
  %v557 = vsel %vm307, %v553, %v555
  %560 = vst [vmem:[#allocation2 + $0x1d0] sm:$0xff] %v556
  %561 = vst [vmem:[#allocation2 + $0x1d8] sm:$0xff] %v557
  %v562 = vld [vmem:[%s1] sm:$0xff]
  %v563 = vld [vmem:[%s1 + $0x8] sm:$0xf]
  %v564 = vld [vmem:[#allocation2] sm:$0xff]
  %v565 = vld [vmem:[#allocation2 + $0x8] sm:$0xff]
  %v566 = vld [vmem:[#allocation2 + $0x10] sm:$0xff]
  %v567 = vld [vmem:[#allocation2 + $0x18] sm:$0xff]
  %v568 = vld [vmem:[#allocation2 + $0x20] sm:$0xff]
  %v569 = vld [vmem:[#allocation2 + $0x28] sm:$0xff]
  %v570 = vld [vmem:[#allocation2 + $0x30] sm:$0xff]
  %v571 = vld [vmem:[#allocation2 + $0x38] sm:$0xff]
  %v572 = vld [vmem:[#allocation2 + $0x40] sm:$0xff]
  %v573 = vld [vmem:[#allocation2 + $0x48] sm:$0xff]
  %v574 = vld [vmem:[#allocation2 + $0x50] sm:$0xff]
  %v575 = vld [vmem:[#allocation2 + $0x58] sm:$0xff]
  %v576 = vld [vmem:[#allocation2 + $0x60] sm:$0xff]
  %v577 = vld [vmem:[#allocation2 + $0x68] sm:$0xff]
  %v578 = vld [vmem:[#allocation2 + $0x70] sm:$0xff]
  %v579 = vld [vmem:[#allocation2 + $0x78] sm:$0xff]
  %v580 = vld [vmem:[#allocation2 + $0x80] sm:$0xff]
  %v581 = vld [vmem:[#allocation2 + $0x88] sm:$0xff]
  %v582 = vld [vmem:[#allocation2 + $0x90] sm:$0xff]
  %v583 = vld [vmem:[#allocation2 + $0x98] sm:$0xff]
  %v584 = vld [vmem:[#allocation2 + $0xa0] sm:$0xff]
  %v585 = vld [vmem:[#allocation2 + $0xa8] sm:$0xff]
  %v586 = vld [vmem:[#allocation2 + $0xb0] sm:$0xff]
  %v587 = vld [vmem:[#allocation2 + $0xb8] sm:$0xff]
  %v588 = vld [vmem:[#allocation2 + $0xc0] sm:$0xff]
  %v589 = vld [vmem:[#allocation2 + $0xc8] sm:$0xff]
  %v590 = vld [vmem:[#allocation2 + $0xd0] sm:$0xff]
  %v591 = vld [vmem:[#allocation2 + $0xd8] sm:$0xff]
  %v592 = vld [vmem:[#allocation2 + $0xe0] sm:$0xff]
  %v593 = vld [vmem:[#allocation2 + $0xe8] sm:$0xff]
  %v594 = vld [vmem:[#allocation2 + $0xf0] sm:$0xff]
  %v595 = vld [vmem:[#allocation2 + $0xf8] sm:$0xff]
  %v596 = vld [vmem:[#allocation2 + $0x100] sm:$0xff]
  %v597 = vld [vmem:[#allocation2 + $0x108] sm:$0xff]
  %v598 = vld [vmem:[#allocation2 + $0x110] sm:$0xff]
  %v599 = vld [vmem:[#allocation2 + $0x118] sm:$0xff]
  %v600 = vld [vmem:[#allocation2 + $0x120] sm:$0xff]
  %v601 = vld [vmem:[#allocation2 + $0x128] sm:$0xff]
  %v602 = vld [vmem:[#allocation2 + $0x130] sm:$0xff]
  %v603 = vld [vmem:[#allocation2 + $0x138] sm:$0xff]
  %v604 = vld [vmem:[#allocation2 + $0x140] sm:$0xff]
  %v605 = vld [vmem:[#allocation2 + $0x148] sm:$0xff]
  %v606 = vld [vmem:[#allocation2 + $0x150] sm:$0xff]
  %v607 = vld [vmem:[#allocation2 + $0x158] sm:$0xff]
  %v608 = vld [vmem:[#allocation2 + $0x160] sm:$0xff]
  %v609 = vld [vmem:[#allocation2 + $0x168] sm:$0xff]
  %v610 = vld [vmem:[#allocation2 + $0x170] sm:$0xff]
  %v611 = vld [vmem:[#allocation2 + $0x178] sm:$0xff]
  %v612 = vld [vmem:[#allocation2 + $0x180] sm:$0xff]
  %v613 = vld [vmem:[#allocation2 + $0x188] sm:$0xff]
  %v614 = vld [vmem:[#allocation2 + $0x190] sm:$0xff]
  %v615 = vld [vmem:[#allocation2 + $0x198] sm:$0xff]
  %v616 = vld [vmem:[#allocation2 + $0x1a0] sm:$0xff]
  %v617 = vld [vmem:[#allocation2 + $0x1a8] sm:$0xff]
  %v618 = vld [vmem:[#allocation2 + $0x1b0] sm:$0xff]
  %v619 = vld [vmem:[#allocation2 + $0x1b8] sm:$0xff]
  %v620 = vld [vmem:[#allocation2 + $0x1c0] sm:$0xff]
  %v621 = vld [vmem:[#allocation2 + $0x1c8] sm:$0xff]
  %v622 = vld [vmem:[#allocation2 + $0x1d0] sm:$0xff]
  %v623 = vld [vmem:[#allocation2 + $0x1d8] sm:$0xff]
  %vm624 = vcmask 982016
  %v626 = vsel %vm624, %v562, 0
  %v629 = vsel %vm624, %v563, 0
  %631 = vmatprep.subr.mxu0 %v565
  %632 = vmatpush1.msra.mxu0 %v564
  %633 = vmatprep.subr.mxu0 %v569
  %634 = vmatpush1.msra.mxu0 %v568
  %635 = vmatprep.subr.mxu0 %v573
  %636 = vmatpush1.msra.mxu0 %v572
  %637 = vmatprep.subr.mxu0 %v577
  %638 = vmatpush1.msra.mxu0 %v576
  %639 = vmatprep.subr.mxu0 %v581
  %640 = vmatpush1.msra.mxu0 %v580
  %641 = vmatprep.subr.mxu0 %v585
  %642 = vmatpush1.msra.mxu0 %v584
  %643 = vmatprep.subr.mxu0 %v589
  %644 = vmatpush1.msra.mxu0 %v588
  %645 = vmatprep.subr.mxu0 %v593
  %646 = vmatpush1.msra.mxu0 %v592
  %647 = vmatprep.subr.mxu0 %v597
  %648 = vmatpush1.msra.mxu0 %v596
  %649 = vmatprep.subr.mxu0 %v601
  %650 = vmatpush1.msra.mxu0 %v600
  %651 = vmatprep.subr.mxu0 %v605
  %652 = vmatpush1.msra.mxu0 %v604
  %653 = vmatprep.subr.mxu0 %v609
  %654 = vmatpush1.msra.mxu0 %v608
  %655 = vmatprep.subr.mxu0 %v613
  %656 = vmatpush1.msra.mxu0 %v612
  %657 = vmatprep.subr.mxu0 %v617
  %658 = vmatpush1.msra.mxu0 %v616
  %659 = vmatprep.subr.mxu0 %v621
  %660 = vmatpush1.msra.mxu0 %v620
  %661 = vmatprep.subr.mxu0 0.0
  %662 = vmatpush1.msra.mxu0 0.0
  %663 = vmatprep.subr.mxu0 0.0
  %664 = vmatpush1.msra.mxu0 0.0
  %665 = vmatprep.subr.mxu0 0.0
  %666 = vmatpush1.msra.mxu0 0.0
  %667 = vmatprep.subr.mxu0 0.0
  %668 = vmatpush1.msra.mxu0 0.0
  %669 = vmatprep.subr.mxu0 0.0
  %670 = vmatpush1.msra.mxu0 0.0
  %671 = vmatprep.subr.mxu0 0.0
  %672 = vmatpush1.msra.mxu0 0.0
  %673 = vmatprep.subr.mxu0 0.0
  %674 = vmatpush1.msra.mxu0 0.0
  %675 = vmatprep.subr.mxu0 0.0
  %676 = vmatpush1.msra.mxu0 0.0
  %677 = vmatprep.subr.mxu0 0.0
  %678 = vmatpush1.msra.mxu0 0.0
  %679 = vmatprep.subr.mxu0 0.0
  %680 = vmatpush1.msra.mxu0 0.0
  %681 = vmatprep.subr.mxu0 0.0
  %682 = vmatpush1.msra.mxu0 0.0
  %683 = vmatprep.subr.mxu0 0.0
  %684 = vmatpush1.msra.mxu0 0.0
  %685 = vmatprep.subr.mxu0 0.0
  %686 = vmatpush1.msra.mxu0 0.0
  %687 = vmatprep.subr.mxu0 0.0
  %688 = vmatpush1.msra.mxu0 0.0
  %689 = vmatprep.subr.mxu0 0.0
  %690 = vmatpush1.msra.mxu0 0.0
  %691 = vmatprep.subr.mxu0 0.0
  %692 = vmatpush1.msra.mxu0 0.0
  %693 = vmatprep.subr.mxu0 0.0
  %694 = vmatpush1.msra.mxu0 0.0
  %695 = vmatprep.mubr.f32.mxu0 0.0
  %696 = vmatmul.mubr.f32.gmra.mrb[0].mxu0 %v626
  %v697 = vpop.f32.mrb[0].mxu0
  %v698 = vadd.f32 0.0, %v697
  %v699 = vpop.f32.mrb[0].mxu0
  %v700 = vadd.f32 0.0, %v699
  %701 = vmatprep.mubr.f32.mxu0 0.0
  %702 = vmatmul.mubr.f32.gmra.mrb[0].mxu0 %v629
  %v703 = vpop.f32.mrb[0].mxu0
  %v704 = vadd.f32 0.0, %v703
  %v705 = vpop.f32.mrb[0].mxu0
  %v706 = vadd.f32 0.0, %v705
  %707 = vdwg.mxu0
  %708 = vmatprep.subr.mxu0 %v567
  %709 = vmatpush1.msra.mxu0 %v566
  %710 = vmatprep.subr.mxu0 %v571
  %711 = vmatpush1.msra.mxu0 %v570
  %712 = vmatprep.subr.mxu0 %v575
  %713 = vmatpush1.msra.mxu0 %v574
  %714 = vmatprep.subr.mxu0 %v579
  %715 = vmatpush1.msra.mxu0 %v578
  %716 = vmatprep.subr.mxu0 %v583
  %717 = vmatpush1.msra.mxu0 %v582
  %718 = vmatprep.subr.mxu0 %v587
  %719 = vmatpush1.msra.mxu0 %v586
  %720 = vmatprep.subr.mxu0 %v591
  %721 = vmatpush1.msra.mxu0 %v590
  %722 = vmatprep.subr.mxu0 %v595
  %723 = vmatpush1.msra.mxu0 %v594
  %724 = vmatprep.subr.mxu0 %v599
  %725 = vmatpush1.msra.mxu0 %v598
  %726 = vmatprep.subr.mxu0 %v603
  %727 = vmatpush1.msra.mxu0 %v602
  %728 = vmatprep.subr.mxu0 %v607
  %729 = vmatpush1.msra.mxu0 %v606
  %730 = vmatprep.subr.mxu0 %v611
  %731 = vmatpush1.msra.mxu0 %v610
  %732 = vmatprep.subr.mxu0 %v615
  %733 = vmatpush1.msra.mxu0 %v614
  %734 = vmatprep.subr.mxu0 %v619
  %735 = vmatpush1.msra.mxu0 %v618
  %736 = vmatprep.subr.mxu0 %v623
  %737 = vmatpush1.msra.mxu0 %v622
  %738 = vmatprep.subr.mxu0 0.0
  %739 = vmatpush1.msra.mxu0 0.0
  %740 = vmatprep.subr.mxu0 0.0
  %741 = vmatpush1.msra.mxu0 0.0
  %742 = vmatprep.subr.mxu0 0.0
  %743 = vmatpush1.msra.mxu0 0.0
  %744 = vmatprep.subr.mxu0 0.0
  %745 = vmatpush1.msra.mxu0 0.0
  %746 = vmatprep.subr.mxu0 0.0
  %747 = vmatpush1.msra.mxu0 0.0
  %748 = vmatprep.subr.mxu0 0.0
  %749 = vmatpush1.msra.mxu0 0.0
  %750 = vmatprep.subr.mxu0 0.0
  %751 = vmatpush1.msra.mxu0 0.0
  %752 = vmatprep.subr.mxu0 0.0
  %753 = vmatpush1.msra.mxu0 0.0
  %754 = vmatprep.subr.mxu0 0.0
  %755 = vmatpush1.msra.mxu0 0.0
  %756 = vmatprep.subr.mxu0 0.0
  %757 = vmatpush1.msra.mxu0 0.0
  %758 = vmatprep.subr.mxu0 0.0
  %759 = vmatpush1.msra.mxu0 0.0
  %760 = vmatprep.subr.mxu0 0.0
  %761 = vmatpush1.msra.mxu0 0.0
  %762 = vmatprep.subr.mxu0 0.0
  %763 = vmatpush1.msra.mxu0 0.0
  %764 = vmatprep.subr.mxu0 0.0
  %765 = vmatpush1.msra.mxu0 0.0
  %766 = vmatprep.subr.mxu0 0.0
  %767 = vmatpush1.msra.mxu0 0.0
  %768 = vmatprep.subr.mxu0 0.0
  %769 = vmatpush1.msra.mxu0 0.0
  %770 = vmatprep.subr.mxu0 0.0
  %771 = vmatpush1.msra.mxu0 0.0
  %772 = vmatprep.mubr.f32.mxu0 0.0
  %773 = vmatmul.mubr.f32.gmra.mrb[0].mxu0 %v626
  %v774 = vpop.f32.mrb[0].mxu0
  %v775 = vadd.f32 0.0, %v774
  %v776 = vpop.f32.mrb[0].mxu0
  %v777 = vadd.f32 0.0, %v776
  %778 = vmatprep.mubr.f32.mxu0 0.0
  %779 = vmatmul.mubr.f32.gmra.mrb[0].mxu0 %v629
  %v780 = vpop.f32.mrb[0].mxu0
  %v781 = vadd.f32 0.0, %v780
  %v782 = vpop.f32.mrb[0].mxu0
  %v783 = vadd.f32 0.0, %v782
  %784 = vdwg.mxu0
  %v785 = vxor.u32 %v698, 2147483648
  %v786 = vxor.u32 %v700, 2147483648
  %v787 = vxor.u32 %v704, 2147483648
  %v788 = vxor.u32 %v706, 2147483648
  %v789 = vmul.f32 %v785, 1.442695
  %v790 = vpow.pop %v789
  %v791 = vmul.f32 %v786, 1.442695
  %v792 = vpow.pop %v791
  %v793 = vmul.f32 %v787, 1.442695
  %v794 = vpow.pop %v793
  %v795 = vmul.f32 %v788, 1.442695
  %v796 = vpow.pop %v795
  %v797 = vadd.f32 %v790, 1.0
  %v798 = vadd.f32 %v792, 1.0
  %v799 = vadd.f32 %v794, 1.0
  %v800 = vadd.f32 %v796, 1.0
  %v801 = vrcp.pop %v797
  %v802 = vmul.f32 1.0, %v801
  %v803 = vrcp.pop %v798
  %v804 = vmul.f32 1.0, %v803
  %v805 = vrcp.pop %v799
  %v806 = vmul.f32 1.0, %v805
  %v807 = vrcp.pop %v800
  %v808 = vmul.f32 1.0, %v807
  %809 = vst [vmem:[%s2] sm:$0xff] %v802
  %810 = vst [vmem:[%s2 + $0x8] sm:$0xff] %v804
  %811 = vst [vmem:[%s2 + $0x10] sm:$0xf] %v806
  %812 = vst [vmem:[%s2 + $0x18] sm:$0xf] %v808
  %v813 = vxor.u32 %v775, 2147483648
  %v814 = vxor.u32 %v777, 2147483648
  %v815 = vxor.u32 %v781, 2147483648
  %v816 = vxor.u32 %v783, 2147483648
  %v817 = vmul.f32 %v813, 1.442695
  %v818 = vpow.pop %v817
  %v819 = vmul.f32 %v814, 1.442695
  %v820 = vpow.pop %v819
  %v821 = vmul.f32 %v815, 1.442695
  %v822 = vpow.pop %v821
  %v823 = vmul.f32 %v816, 1.442695
  %v824 = vpow.pop %v823
  %v825 = vadd.f32 %v818, 1.0
  %v826 = vadd.f32 %v820, 1.0
  %v827 = vadd.f32 %v822, 1.0
  %v828 = vadd.f32 %v824, 1.0
  %v829 = vrcp.pop %v825
  %v830 = vmul.f32 1.0, %v829
  %v831 = vrcp.pop %v826
  %v832 = vmul.f32 1.0, %v831
  %v833 = vrcp.pop %v827
  %v834 = vmul.f32 1.0, %v833
  %v835 = vrcp.pop %v828
  %v836 = vmul.f32 1.0, %v835
  %s837 = scalar_lea.vmem %s2, 32
  %838 = vst [vmem:[%s837] sm:$0xff] %v830
  %839 = vst [vmem:[%s837 + $0x8] sm:$0xff] %v832
  %840 = vst [vmem:[%s837 + $0x10] sm:$0xf] %v834
  %841 = vst [vmem:[%s837 + $0x18] sm:$0xf] %v836
  // Predicated region
  $region10: #{conv_transpose_sigmoid.1} parent=0 // pred_check
    _
  $region11: #{conv_transpose_sigmoid.1} parent=0 // pred_check_branch
    %843 = sbr.rel (0) target = $region13
  $region12: #{conv_transpose_sigmoid.1} parent=0 // pred_region
    _
  $region13: #{conv_transpose_sigmoid.1} parent=0 // pred_fallthru
    _
  // Predicated region
  $region14: #{conv_transpose_sigmoid.1} parent=0 // pred_check
    _
  $region15: #{conv_transpose_sigmoid.1} parent=0 // pred_check_branch
    %845 = sbr.rel (0) target = $region17
  $region16: #{conv_transpose_sigmoid.1} parent=0 // pred_region
    _
  $region17: #{conv_transpose_sigmoid.1} parent=0 // pred_fallthru
    _

</llo_original>
